<compile_context>
chip_gen: v5e
topology: v5e:2x2
jax: 0.10.0
libtpu: 0.0.40
codegen_flags: <defaults>
</compile_context>

<pallas_src>
import jax
import jax.numpy as jnp
from jax.experimental import pallas as pl
from jax.experimental.pallas import tpu as pltpu


def _round_up(x, m):
    return ((x + m - 1) // m) * m


def _cdiv(a, b):
    return (a + b - 1) // b


def _make_patch_embed_kernel(e_real, e_pad):
    """Kernel factory: closes over real/padded embed_dim (static)."""
    inv_e = 1.0 / float(e_real)

    def kernel(x_ref, w_ref, p_ref, o_ref):
        # x_ref: [TILE_T, K_pad]  flattened patches (native/compute dtype)
        # w_ref: [K_pad, E_pad]   projection weight (VMEM resident, zero-padded)
        # p_ref: [3, E_pad]       f32 rows: 0 = conv bias, 1 = LN gamma, 2 = LN beta
        # o_ref: [TILE_T, E_pad]
        # MXU matmul in the operands' native dtype, f32 accumulation.
        y = jnp.dot(x_ref[...], w_ref[...], preferred_element_type=jnp.float32)
        y = y + p_ref[0:1, :]

        # LayerNorm over the *real* embed_dim (padded columns of y are
        # exactly zero because w/bias are zero-padded); eps=1e-5, biased
        # variance -- matches torch.nn.LayerNorm defaults.
        mean = jnp.sum(y, axis=-1, keepdims=True) * inv_e
        centered = y - mean
        if e_pad != e_real:
            col = jax.lax.broadcasted_iota(jnp.int32, y.shape, 1)
            centered_m = jnp.where(col < e_real, centered, 0.0)
        else:
            centered_m = centered
        var = jnp.sum(centered_m * centered_m, axis=-1, keepdims=True) * inv_e
        y_norm = centered * jax.lax.rsqrt(var + 1e-5)

        out = y_norm * p_ref[1:2, :] + p_ref[2:3, :]
        o_ref[...] = out.astype(o_ref.dtype)

    return kernel


def patch_embedding(x, w_flat, b, gamma, beta, *, patch_size, tile_t=512,
                    compute_dtype=None):
    """x: [B, C, H, W] (NCHW). Returns [B, n_patches, embed_dim].

    w_flat: [C*p*p, embed_dim] = conv weight [E, C, p, p] reshaped+transposed.
    compute_dtype: optional MXU operand dtype (e.g. jnp.bfloat16); the
      matmul always accumulates in f32 and LayerNorm runs in f32.
    """
    B, C, H, W = x.shape
    p = patch_size
    assert H % p == 0 and W % p == 0
    hp, wp = H // p, W // p
    n_patches = hp * wp
    k_dim = C * p * p
    embed_dim = w_flat.shape[1]
    out_dtype = x.dtype

    cdt = jnp.dtype(compute_dtype) if compute_dtype is not None else jnp.dtype(x.dtype)

    # Lane-dense padding of BOTH matmul dims (unmasked vld/vst + full MXU fill).
    e_pad = _round_up(embed_dim, 128)
    k_pad = _round_up(k_dim, 128)

    # --- Patchify: one XLA rearrangement pass (cast + k-pad fuse into it). ---
    # NCHW -> [T, K]: patches row-major over (hp, wp), each flattened (C, p, p)
    # to match the conv weight layout; matches `.flatten(2).transpose(1, 2)`.
    xc = x.astype(cdt)
    patches = xc.reshape(B, C, hp, p, wp, p)
    patches = patches.transpose(0, 2, 4, 1, 3, 5).reshape(B * n_patches, k_dim)
    if k_pad != k_dim:
        patches = jnp.pad(patches, ((0, 0), (0, k_pad - k_dim)))
    T = B * n_patches

    w_p = w_flat.astype(cdt)
    if k_pad != k_dim or e_pad != embed_dim:
        w_p = jnp.pad(w_p, ((0, k_pad - k_dim), (0, e_pad - embed_dim)))

    # bias / gamma / beta packed into one small resident f32 operand.
    params = jnp.stack([
        jnp.pad(b.astype(jnp.float32), (0, e_pad - embed_dim)),
        jnp.pad(gamma.astype(jnp.float32), (0, e_pad - embed_dim)),
        jnp.pad(beta.astype(jnp.float32), (0, e_pad - embed_dim)),
    ], axis=0)                                             # [3, E_pad]

    # --- Token tiling: no T padding; ragged last block is masked by Pallas.
    # Steer towards >= 2 (target ~4) tiles so the "parallel" axis gives both
    # pipelining and the v7x 2-TensorCore split.
    itemsize = cdt.itemsize
    sub = max(8, 32 // max(1, itemsize))       # f32 -> 8, bf16 -> 16, int8 -> 32
    tile = min(_round_up(tile_t, sub),
               _round_up(T, sub),
               max(sub, _round_up(_cdiv(T, 4), sub)))
    num_tiles = _cdiv(T, tile)

    # --- VMEM budget derived from actual buffers (not a fixed 48 MiB). ---
    out_itemsize = jnp.dtype(out_dtype).itemsize
    vmem_bytes = (2 * tile * k_pad * itemsize          # double-buffered patch tiles
                  + 2 * k_pad * e_pad * itemsize       # resident weight (2 bufs)
                  + 2 * 8 * e_pad * 4                  # params (sublane-padded)
                  + 2 * tile * e_pad * out_itemsize)   # double-buffered out tiles
    vmem_limit = int(min(max(vmem_bytes + (2 << 20), 4 << 20), 100 << 20))

    cost = pl.CostEstimate(
        flops=2 * T * k_pad * e_pad,
        transcendentals=T,
        bytes_accessed=(T * k_pad * itemsize           # patches in
                        + k_pad * e_pad * itemsize     # weight
                        + 3 * e_pad * 4                # bias/gamma/beta
                        + T * e_pad * out_itemsize),   # output
    )

    kernel = _make_patch_embed_kernel(embed_dim, e_pad)

    out = pl.pallas_call(
        kernel,
        out_shape=jax.ShapeDtypeStruct((T, e_pad), out_dtype),
        grid_spec=pltpu.PrefetchScalarGridSpec(
            num_scalar_prefetch=0,
            grid=(num_tiles,),
            in_specs=[
                pl.BlockSpec((tile, k_pad), lambda i: (i, 0)),   # patches: tiled
                pl.BlockSpec((k_pad, e_pad), lambda i: (0, 0)),  # weight: resident
                pl.BlockSpec((3, e_pad), lambda i: (0, 0)),      # bias/gamma/beta
            ],
            out_specs=pl.BlockSpec((tile, e_pad), lambda i: (i, 0)),
        ),
        compiler_params=pltpu.CompilerParams(
            dimension_semantics=("parallel",),
            vmem_limit_bytes=vmem_limit,
        ),
        cost_estimate=cost,
    )(patches, w_p, params)

    out = out[:, :embed_dim]
    return out.reshape(B, n_patches, embed_dim)


if __name__ == "__main__":
    # Small, module-consistent shapes:
    #   img_size=32, patch_size=8 -> n_patches = (32//8)**2 = 16
    #   in_channels=4, embed_dim=32, batch=2  ->  T = 32 tokens, K = 256
    B, C, H, W = 2, 4, 32, 32
    patch_size = 8
    embed_dim = 32
    k_dim = C * patch_size * patch_size

    key = jax.random.PRNGKey(0)
    kx, kw, kb = jax.random.split(key, 3)

    x = jax.random.normal(kx, (B, C, H, W), dtype=jnp.float32)
    # Conv weight pre-flattened from [E, C, p, p] to [C*p*p, E].
    w_flat = jax.random.normal(kw, (k_dim, embed_dim), dtype=jnp.float32) * 0.02
    b = jax.random.normal(kb, (embed_dim,), dtype=jnp.float32) * 0.02
    gamma = jnp.ones((embed_dim,), dtype=jnp.float32)   # LayerNorm weight
    beta = jnp.zeros((embed_dim,), dtype=jnp.float32)   # LayerNorm bias

    hp, wp = H // patch_size, W // patch_size
    n_patches = hp * wp

    def reference(xin, win):
        ref_p = xin.reshape(B, C, hp, patch_size, wp, patch_size)
        ref_p = ref_p.transpose(0, 2, 4, 1, 3, 5).reshape(B * n_patches, k_dim)
        ref_y = ref_p @ win + b
        mu = jnp.mean(ref_y, axis=-1, keepdims=True)
        va = jnp.mean((ref_y - mu) ** 2, axis=-1, keepdims=True)
        r = ((ref_y - mu) / jnp.sqrt(va + 1e-5)) * gamma + beta
        return r.reshape(B, n_patches, embed_dim)

    # f32 path.
    out = patch_embedding(x, w_flat, b, gamma, beta, patch_size=patch_size)
    jax.block_until_ready(out)
    assert out.shape == (B, n_patches, embed_dim)
    ref = reference(x, w_flat)
    assert jnp.allclose(out, ref, atol=1e-4, rtol=1e-4), "f32 mismatch vs reference"

    # bf16 MXU-operand path (f32 accumulation + f32 LayerNorm epilogue).
    out_bf16 = patch_embedding(x, w_flat, b, gamma, beta, patch_size=patch_size,
                               compute_dtype=jnp.bfloat16)
    jax.block_until_ready(out_bf16)
    assert out_bf16.shape == (B, n_patches, embed_dim)
    ref_bf16 = reference(x.astype(jnp.bfloat16).astype(jnp.float32),
                         w_flat.astype(jnp.bfloat16).astype(jnp.float32))
    assert jnp.allclose(out_bf16, ref_bf16, atol=5e-3, rtol=5e-3), \
        "bf16 mismatch vs reference"

    print("KERNEL_OK")
</pallas_src>

<mosaic_0001>
module attributes {stable_mosaic.version = 11 : i64} {
  func.func @kernel(%arg0: i32, %arg1: memref<8x256xf32, #tpu.memory_space<vmem>>, %arg2: memref<256x128xf32, #tpu.memory_space<vmem>>, %arg3: memref<3x128xf32, #tpu.memory_space<vmem>>, %arg4: memref<8x128xf32, #tpu.memory_space<vmem>>) attributes {dimension_semantics = [#tpu.dimension_semantics<parallel>], iteration_bounds = array<i64: 4>, scalar_prefetch = 0 : i64, scratch_operands = 0 : i64, tpu.core_type = #tpu.core_type<tc>, window_params = [{transform_indices = @transform_0, window_bounds = array<i64: 8, 256>}, {pipeline_mode = #tpu.pipeline_mode<synchronous>, transform_indices = @transform_1, window_bounds = array<i64: 256, 128>}, {pipeline_mode = #tpu.pipeline_mode<synchronous>, transform_indices = @transform_2, window_bounds = array<i64: 3, 128>}, {transform_indices = @transform_3, window_bounds = array<i64: 8, 128>}]} {
    %c0 = arith.constant 0 : index
    %c0_0 = arith.constant 0 : index
    %0 = vector.load %arg1[%c0, %c0_0] : memref<8x256xf32, #tpu.memory_space<vmem>>, vector<8x256xf32>
    %c0_1 = arith.constant 0 : index
    %c0_2 = arith.constant 0 : index
    %1 = vector.load %arg2[%c0_1, %c0_2] : memref<256x128xf32, #tpu.memory_space<vmem>>, vector<256x128xf32>
    %cst = arith.constant dense<0.000000e+00> : vector<8x128xf32>
    %2 = tpu.matmul %0, %1, %cst {dimension_numbers = #tpu.dot_dimension_numbers<[1], [0], [0], [1], [0, 0, 1, 1], [], []>} : vector<8x256xf32>, vector<256x128xf32>, vector<8x128xf32> -> vector<8x128xf32>
    %c0_3 = arith.constant 0 : index
    %c0_4 = arith.constant 0 : index
    %3 = vector.load %arg3[%c0_3, %c0_4] : memref<3x128xf32, #tpu.memory_space<vmem>>, vector<1x128xf32>
    %4 = vector.broadcast %3 : vector<1x128xf32> to vector<8x128xf32>
    %5 = arith.addf %2, %4 : vector<8x128xf32>
    %cst_5 = arith.constant dense<0.000000e+00> : vector<8xf32>
    %6 = vector.multi_reduction <add>, %5, %cst_5 [1] : vector<8x128xf32> to vector<8xf32>
    %7 = vector.shape_cast %6 : vector<8xf32> to vector<8x1xf32>
    %cst_6 = arith.constant 3.125000e-02 : f32
    %8 = vector.broadcast %cst_6 : f32 to vector<8x1xf32>
    %9 = arith.mulf %7, %8 : vector<8x1xf32>
    %10 = vector.broadcast %9 : vector<8x1xf32> to vector<8x128xf32>
    %11 = arith.subf %5, %10 : vector<8x128xf32>
    %12 = tpu.iota {dimensions = array<i32: 1>} : vector<8x128xi32>
    %c32_i32 = arith.constant 32 : i32
    %13 = vector.broadcast %c32_i32 : i32 to vector<8x128xi32>
    %14 = arith.cmpi slt, %12, %13 : vector<8x128xi32>
    %cst_7 = arith.constant 0.000000e+00 : f32
    %15 = vector.broadcast %cst_7 : f32 to vector<8x128xf32>
    %16 = arith.select %14, %11, %15 : vector<8x128xi1>, vector<8x128xf32>
    %17 = arith.mulf %16, %16 : vector<8x128xf32>
    %cst_8 = arith.constant dense<0.000000e+00> : vector<8xf32>
    %18 = vector.multi_reduction <add>, %17, %cst_8 [1] : vector<8x128xf32> to vector<8xf32>
    %19 = vector.shape_cast %18 : vector<8xf32> to vector<8x1xf32>
    %cst_9 = arith.constant 3.125000e-02 : f32
    %20 = vector.broadcast %cst_9 : f32 to vector<8x1xf32>
    %21 = arith.mulf %19, %20 : vector<8x1xf32>
    %cst_10 = arith.constant 9.99999974E-6 : f32
    %22 = vector.broadcast %cst_10 : f32 to vector<8x1xf32>
    %23 = arith.addf %21, %22 : vector<8x1xf32>
    %24 = math.rsqrt %23 : vector<8x1xf32>
    %25 = vector.broadcast %24 : vector<8x1xf32> to vector<8x128xf32>
    %26 = arith.mulf %11, %25 : vector<8x128xf32>
    %c1 = arith.constant 1 : index
    %c0_11 = arith.constant 0 : index
    %27 = vector.load %arg3[%c1, %c0_11] : memref<3x128xf32, #tpu.memory_space<vmem>>, vector<1x128xf32>
    %28 = vector.broadcast %27 : vector<1x128xf32> to vector<8x128xf32>
    %29 = arith.mulf %26, %28 : vector<8x128xf32>
    %c2 = arith.constant 2 : index
    %c0_12 = arith.constant 0 : index
    %30 = vector.load %arg3[%c2, %c0_12] : memref<3x128xf32, #tpu.memory_space<vmem>>, vector<1x128xf32>
    %31 = vector.broadcast %30 : vector<1x128xf32> to vector<8x128xf32>
    %32 = arith.addf %29, %31 : vector<8x128xf32>
    %c0_13 = arith.constant 0 : index
    %c0_14 = arith.constant 0 : index
    %33 = vector.load %arg4[%c0_13, %c0_14] : memref<8x128xf32, #tpu.memory_space<vmem>>, vector<8x128xf32>
    tpu.vector_store %arg4[%c0_13, %c0_14], %32 {strides = array<i32>} : memref<8x128xf32, #tpu.memory_space<vmem>>, vector<8x128xf32>,
    return
  }
  func.func @transform_0(%arg0: i32) -> (i32, i32) {
    %c0_i32 = arith.constant 0 : i32
    %c0_i32_0 = arith.constant 0 : i32
    return %arg0, %c0_i32 : i32, i32
  }
  func.func @transform_1(%arg0: i32) -> (i32, i32) {
    %c0_i32 = arith.constant 0 : i32
    %c0_i32_0 = arith.constant 0 : i32
    %c0_i32_1 = arith.constant 0 : i32
    return %c0_i32, %c0_i32_0 : i32, i32
  }
  func.func @transform_2(%arg0: i32) -> (i32, i32) {
    %c0_i32 = arith.constant 0 : i32
    %c0_i32_0 = arith.constant 0 : i32
    %c0_i32_1 = arith.constant 0 : i32
    return %c0_i32, %c0_i32_0 : i32, i32
  }
  func.func @transform_3(%arg0: i32) -> (i32, i32) {
    %c0_i32 = arith.constant 0 : i32
    %c0_i32_0 = arith.constant 0 : i32
    return %arg0, %c0_i32 : i32, i32
  }
}

</mosaic_0001>

<llo_original>
// kernel: tpu_custom_call.1
$region0: #{tpu_custom_call.1}
  #allocation0 [shape = 'u32[]', space=smem, size = 0x4, offset = 0x4, fixed_abs, tag = 'smem constant byte address 0x4 - core index']
  #allocation1 [shape = 'u32[72,128]{1,0:T(1,128)}', space=vmem, size = 0x9000, scoped, tag = 'internal scratch']
  %s0 = inlined_call_operand.hbm [shape: f32[32,256], index: 0, kind: input, shape index: {}]
  %s1 = inlined_call_operand.hbm [shape: f32[256,128], index: 1, kind: input, shape index: {}]
  %s2 = inlined_call_operand.hbm [shape: f32[3,128], index: 2, kind: input, shape index: {}]
  %s3 = inlined_call_operand.hbm [shape: f32[32,128], index: 3, kind: output, shape index: {}]
  %s4 = sld [smem:[#allocation0]]
  $region57: #{tpu_custom_call.1} parent=0
    _
  %s6 = ssub.s32 1, %s4
  %s7 = scalar_select 0, %s6, %s4
  $region1: #{tpu_custom_call.1} parent=0
    #allocation2 [shape = 'u8[16384]{0}', space=vmem, size = 0x4000, scoped, tag = 'input window, operand 0']
    #allocation3 [shape = 's32[2]{0}', space=sflag, size = 0x8, scoped, tag = 'scoped memory for tpu_custom_call.1']
    #allocation4 [shape = 's32[2]{0}', space=sflag, size = 0x8, scoped, tag = 'scoped memory for tpu_custom_call.1']
    #allocation5 [shape = 'u8[131072]{0}', space=vmem, size = 0x20000, scoped, tag = 'input window, operand 1, single buffered']
    #allocation6 [shape = 's32[1]{0}', space=sflag, size = 0x4, scoped, tag = 'scoped memory for tpu_custom_call.1']
    #allocation7 [shape = 'u8[2048]{0}', space=vmem, size = 0x800, scoped, tag = 'input window, operand 2, single buffered']
    #allocation8 [shape = 'u8[8192]{0}', space=vmem, size = 0x2000, scoped, tag = 'output window, operand 0']
    %8 = vsyncpa [#allocation3], 0
    %s9 = scalar_lea.sflag [#allocation3], 1
    %10 = vsyncpa %s9, 0
    %11 = vsyncpa [#allocation6], 0
    %12 = vsyncpa [#allocation4], 0
    %s13 = scalar_lea.sflag [#allocation4], 1
    %14 = vsyncpa %s13, 0
    loop: start=0, step=1, limit=6
    $region2: #{tpu_custom_call.1} parent=1 // loop_pre_header
      _
    $region3: #{tpu_custom_call.1} parent=1 // loop_header
      %s16 = sphi 0, %s20
      %p17 = scmp.ge.s32.totalorder %s16, 6
      %s26 = sphi 0, %s28
      %s29 = sphi 0, %s26
      %s30 = sphi 0, %s29
      %s46 = sphi 0, %s30
      %s50 = sphi 0, %s50
      %s52 = sphi 0, %s50
      %s53 = sphi 0, %s52
      %s67 = sphi 0, %s53
      %s71 = sphi 0, %s71
      %s73 = sphi 0, %s71
      %s74 = sphi 0, %s73
      %s88 = sphi 0, %s74
      %s94 = sphi 0, %s96
      %s97 = sphi 0, %s94
      %s98 = sphi 0, %s97
      %s114 = sphi 0, %s98
    $region4: #{tpu_custom_call.1} parent=1 // loop_header_branch
      %19 = sbr.rel (%p17) target = $region8
    $region5: #{tpu_custom_call.1} parent=1 // loop_body
      %s21 = ssub.s32 %s16, 1
      %s22 = ssub.s32 %s16, 2
      %s23 = sadd.s32 %s16, 1
      %s24 = ssub.s32 %s16, %s23
      %p25 = scmp.eq.s32.totalorder %s24, 0
      %s27 = sadd.s32 %s26, 1
      %s28 = scalar_select %p25, %s26, %s27
      %p31 = pneg %p25
      %p32 = scmp.eq.s32.totalorder %s16, 3
      %p33 = por %p31, %p32
      %p34 = scmp.ne.s32.totalorder %s26, %s29
      %p35 = scmp.eq.s32.totalorder %s16, 0
      %p36 = por %p34, %p35
      %p37 = scmp.ne.s32.totalorder %s26, %s29
      %p38 = scmp.eq.s32.totalorder %s21, 3
      %p39 = por %p37, %p38
      %p40 = scmp.ne.s32.totalorder %s29, %s30
      %p41 = scmp.eq.s32.totalorder %s21, 0
      %p42 = por %p40, %p41
      %p43 = scmp.ne.s32.totalorder %s29, %s30
      %p44 = scmp.eq.s32.totalorder %s22, 3
      %p45 = por %p43, %p44
      %p47 = scmp.ne.s32.totalorder %s30, %s46
      %p48 = scmp.eq.s32.totalorder %s22, 0
      %p49 = por %p47, %p48
      %s51 = sadd.s32 %s50, 1
      %p54 = scmp.eq.s32.totalorder %s16, 3
      %p55 = scmp.ne.s32.totalorder %s50, %s52
      %p56 = scmp.eq.s32.totalorder %s16, 0
      %p57 = por %p55, %p56
      %p58 = scmp.ne.s32.totalorder %s50, %s52
      %p59 = scmp.eq.s32.totalorder %s21, 3
      %p60 = por %p58, %p59
      %p61 = scmp.ne.s32.totalorder %s52, %s53
      %p62 = scmp.eq.s32.totalorder %s21, 0
      %p63 = por %p61, %p62
      %p64 = scmp.ne.s32.totalorder %s52, %s53
      %p65 = scmp.eq.s32.totalorder %s22, 3
      %p66 = por %p64, %p65
      %p68 = scmp.ne.s32.totalorder %s53, %s67
      %p69 = scmp.eq.s32.totalorder %s22, 0
      %p70 = por %p68, %p69
      %s72 = sadd.s32 %s71, 1
      %p75 = scmp.eq.s32.totalorder %s16, 3
      %p76 = scmp.ne.s32.totalorder %s71, %s73
      %p77 = scmp.eq.s32.totalorder %s16, 0
      %p78 = por %p76, %p77
      %p79 = scmp.ne.s32.totalorder %s71, %s73
      %p80 = scmp.eq.s32.totalorder %s21, 3
      %p81 = por %p79, %p80
      %p82 = scmp.ne.s32.totalorder %s73, %s74
      %p83 = scmp.eq.s32.totalorder %s21, 0
      %p84 = por %p82, %p83
      %p85 = scmp.ne.s32.totalorder %s73, %s74
      %p86 = scmp.eq.s32.totalorder %s22, 3
      %p87 = por %p85, %p86
      %p89 = scmp.ne.s32.totalorder %s74, %s88
      %p90 = scmp.eq.s32.totalorder %s22, 0
      %p91 = por %p89, %p90
      %s92 = ssub.s32 %s16, %s23
      %p93 = scmp.eq.s32.totalorder %s92, 0
      %s95 = sadd.s32 %s94, 1
      %s96 = scalar_select %p93, %s94, %s95
      %p99 = pneg %p93
      %p100 = scmp.eq.s32.totalorder %s16, 3
      %p101 = por %p99, %p100
      %p102 = scmp.ne.s32.totalorder %s94, %s97
      %p103 = scmp.eq.s32.totalorder %s16, 0
      %p104 = por %p102, %p103
      %p105 = scmp.ne.s32.totalorder %s94, %s97
      %p106 = scmp.eq.s32.totalorder %s21, 3
      %p107 = por %p105, %p106
      %p108 = scmp.ne.s32.totalorder %s97, %s98
      %p109 = scmp.eq.s32.totalorder %s21, 0
      %p110 = por %p108, %p109
      %p111 = scmp.ne.s32.totalorder %s97, %s98
      %p112 = scmp.eq.s32.totalorder %s22, 3
      %p113 = por %p111, %p112
      %p115 = scmp.ne.s32.totalorder %s98, %s114
      %p116 = scmp.eq.s32.totalorder %s22, 0
      %p117 = por %p115, %p116
      %p118 = scmp.le.s32.totalorder 1, %s16
      %p119 = scmp.lt.s32.totalorder %s16, 5
      %p120 = pnand %p118, %p119
      %p121 = pneg %p120
      // Predicated region
      $region9: #{tpu_custom_call.1} parent=5 // pred_check
        _
      $region10: #{tpu_custom_call.1} parent=5 // pred_check_branch
        %123 = sbr.rel (%p120) target = $region12
      $region11: #{tpu_custom_call.1} parent=5 // pred_region
        %s124 = ssub.s32 %s16, 1
        // Predicated region
        $region13: #{tpu_custom_call.1} parent=11 // pred_check
          %p125 = pneg %p63
        $region14: #{tpu_custom_call.1} parent=11 // pred_check_branch
          %127 = sbr.rel (%p125) target = $region16
        $region15: #{tpu_custom_call.1} parent=11 // pred_region
          %129 = vsyncadd [#allocation6], 0
          %s130 = sshll.u32 %s1, 4
          %s131 = int_to_ptr.hbm [resolvable:$true] %s130
          %s132 = sshll.u32 [#allocation5], 4
          %s133 = int_to_ptr.vmem [resolvable:$true] %s132
          %138 = dma.hbm_to_vmem [thread:$0]  %s131, 4096, %s133, [#allocation6], 128, 128, 8
        $region16: #{tpu_custom_call.1} parent=11 // pred_fallthru
          _
        // Predicated region
        $region17: #{tpu_custom_call.1} parent=11 // pred_check
          %p139 = pneg %p84
        $region18: #{tpu_custom_call.1} parent=11 // pred_check_branch
          %141 = sbr.rel (%p139) target = $region20
        $region19: #{tpu_custom_call.1} parent=11 // pred_region
          %143 = vsyncadd [#allocation6], 0
          %s145 = sshll.u32 %s2, 4
          %s146 = int_to_ptr.hbm [resolvable:$true] %s145
          %s147 = sshll.u32 [#allocation7], 4
          %s148 = int_to_ptr.vmem [resolvable:$true] %s147
          %150 = dma.hbm_to_vmem [thread:$0]  %s146, 64, %s148, [#allocation6]
        $region20: #{tpu_custom_call.1} parent=11 // pred_fallthru
          _
      $region12: #{tpu_custom_call.1} parent=5 // pred_fallthru
        _
      %p151 = scmp.lt.s32.totalorder %s16, 4
      // Predicated region
      $region21: #{tpu_custom_call.1} parent=5 // pred_check
        %p152 = pneg %p151
      $region22: #{tpu_custom_call.1} parent=5 // pred_check_branch
        %154 = sbr.rel (%p152) target = $region24
      $region23: #{tpu_custom_call.1} parent=5 // pred_region
        // Predicated region
        $region25: #{tpu_custom_call.1} parent=23 // pred_check
          %p155 = pneg %p36
        $region26: #{tpu_custom_call.1} parent=23 // pred_check_branch
          %157 = sbr.rel (%p155) target = $region28
        $region27: #{tpu_custom_call.1} parent=23 // pred_region
          %s158 = sand.u32 %s26, 1
          %s159 = scalar_lea.sflag [#allocation3], %s158
          %s160 = sand.u32 %s26, 1
          %s161 = smul.addr %s160, 16
          %s162 = scalar_lea.vmem [#allocation2], %s161
          %164 = vsyncadd %s159, 0
          %s165 = smul.addr %s16, 2
          %s166 = smul.addr %s165, 8
          %s167 = scalar_lea.hbm %s0, %s166
          %s169 = sshll.u32 %s167, 4
          %s170 = int_to_ptr.hbm [resolvable:$true] %s169
          %s171 = sshll.u32 %s162, 4
          %s172 = int_to_ptr.vmem [resolvable:$true] %s171
          %174 = dma.hbm_to_vmem [thread:$0]  %s170, 256, %s172, %s159
        $region28: #{tpu_custom_call.1} parent=23 // pred_fallthru
          _
      $region24: #{tpu_custom_call.1} parent=5 // pred_fallthru
        _
      %p175 = scmp.le.s32.totalorder 1, %s16
      %p176 = scmp.lt.s32.totalorder %s16, 5
      %p177 = pnand %p175, %p176
      %p178 = pneg %p177
      // Predicated region
      $region29: #{tpu_custom_call.1} parent=5 // pred_check
        _
      $region30: #{tpu_custom_call.1} parent=5 // pred_check_branch
        %180 = sbr.rel (%p177) target = $region32
      $region31: #{tpu_custom_call.1} parent=5 // pred_region
        %s181 = ssub.s32 %s16, 1
        %s182 = sand.u32 %s29, 1
        %s183 = scalar_lea.sflag [#allocation3], %s182
        %s184 = sand.u32 %s29, 1
        %s185 = smul.addr %s184, 16
        %s186 = scalar_lea.vmem [#allocation2], %s185
        // Predicated region
        $region33: #{tpu_custom_call.1} parent=31 // pred_check
          %p187 = pneg %p42
        $region34: #{tpu_custom_call.1} parent=31 // pred_check_branch
          %189 = sbr.rel (%p187) target = $region36
        $region35: #{tpu_custom_call.1} parent=31 // pred_region
          %191 = dma.done %s183, 256
        $region36: #{tpu_custom_call.1} parent=31 // pred_fallthru
          _
        // Predicated region
        $region37: #{tpu_custom_call.1} parent=31 // pred_check
          %p192 = pneg %p63
        $region38: #{tpu_custom_call.1} parent=31 // pred_check_branch
          %194 = sbr.rel (%p192) target = $region40
        $region39: #{tpu_custom_call.1} parent=31 // pred_region
          %196 = dma.done [#allocation6], 4096
        $region40: #{tpu_custom_call.1} parent=31 // pred_fallthru
          _
        // Predicated region
        $region41: #{tpu_custom_call.1} parent=31 // pred_check
          %p197 = pneg %p84
        $region42: #{tpu_custom_call.1} parent=31 // pred_check_branch
          %199 = sbr.rel (%p197) target = $region44
        $region43: #{tpu_custom_call.1} parent=31 // pred_region
          %201 = dma.done [#allocation6], 64
        $region44: #{tpu_custom_call.1} parent=31 // pred_fallthru
          _
        %s202 = sand.u32 %s29, 1
        %s203 = scalar_lea.sflag [#allocation3], %s202
        %s204 = sand.u32 %s29, 1
        %s205 = smul.addr %s204, 16
        %s206 = scalar_lea.vmem [#allocation2], %s205
        %p207 = pneg %p42
        %p208 = pneg %p39
        %p209 = pneg %p63
        %p210 = pneg %p60
        %p211 = pneg %p84
        %p212 = pneg %p81
        %p213 = pneg %p110
        %p214 = pneg %p107
        %s215 = sand.u32 %s97, 1
        %s216 = scalar_lea.sflag [#allocation4], %s215
        %s217 = sand.u32 %s97, 1
        %s218 = smul.addr %s217, 8
        %s219 = scalar_lea.vmem [#allocation8], %s218
        %v220 = vld [vmem:[%s186] sm:$0xff]
        %v221 = vld [vmem:[%s186 + $0x8] sm:$0xff]
        %v222 = vld [vmem:[#allocation5] sm:$0xff]
        %v223 = vld [vmem:[#allocation5 + $0x8] sm:$0xff]
        %v224 = vld [vmem:[#allocation5 + $0x10] sm:$0xff]
        %v225 = vld [vmem:[#allocation5 + $0x18] sm:$0xff]
        %v226 = vld [vmem:[#allocation5 + $0x20] sm:$0xff]
        %v227 = vld [vmem:[#allocation5 + $0x28] sm:$0xff]
        %v228 = vld [vmem:[#allocation5 + $0x30] sm:$0xff]
        %v229 = vld [vmem:[#allocation5 + $0x38] sm:$0xff]
        %v230 = vld [vmem:[#allocation5 + $0x40] sm:$0xff]
        %v231 = vld [vmem:[#allocation5 + $0x48] sm:$0xff]
        %v232 = vld [vmem:[#allocation5 + $0x50] sm:$0xff]
        %v233 = vld [vmem:[#allocation5 + $0x58] sm:$0xff]
        %v234 = vld [vmem:[#allocation5 + $0x60] sm:$0xff]
        %v235 = vld [vmem:[#allocation5 + $0x68] sm:$0xff]
        %v236 = vld [vmem:[#allocation5 + $0x70] sm:$0xff]
        %v237 = vld [vmem:[#allocation5 + $0x78] sm:$0xff]
        %v238 = vld [vmem:[#allocation5 + $0x80] sm:$0xff]
        %v239 = vld [vmem:[#allocation5 + $0x88] sm:$0xff]
        %v240 = vld [vmem:[#allocation5 + $0x90] sm:$0xff]
        %v241 = vld [vmem:[#allocation5 + $0x98] sm:$0xff]
        %v242 = vld [vmem:[#allocation5 + $0xa0] sm:$0xff]
        %v243 = vld [vmem:[#allocation5 + $0xa8] sm:$0xff]
        %v244 = vld [vmem:[#allocation5 + $0xb0] sm:$0xff]
        %v245 = vld [vmem:[#allocation5 + $0xb8] sm:$0xff]
        %v246 = vld [vmem:[#allocation5 + $0xc0] sm:$0xff]
        %v247 = vld [vmem:[#allocation5 + $0xc8] sm:$0xff]
        %v248 = vld [vmem:[#allocation5 + $0xd0] sm:$0xff]
        %v249 = vld [vmem:[#allocation5 + $0xd8] sm:$0xff]
        %v250 = vld [vmem:[#allocation5 + $0xe0] sm:$0xff]
        %v251 = vld [vmem:[#allocation5 + $0xe8] sm:$0xff]
        %v252 = vld [vmem:[#allocation5 + $0xf0] sm:$0xff]
        %v253 = vld [vmem:[#allocation5 + $0xf8] sm:$0xff]
        %v254 = vld [vmem:[#allocation7] sm:$0x1]
        %v255 = vperm.slane %v254, 0
        %256 = vmatpush.msra.mxu0 %v237
        %257 = vmatpush.msra.mxu0 %v236
        %258 = vmatpush.msra.mxu0 %v235
        %259 = vmatpush.msra.mxu0 %v234
        %260 = vmatpush.msra.mxu0 %v233
        %261 = vmatpush.msra.mxu0 %v232
        %262 = vmatpush.msra.mxu0 %v231
        %263 = vmatpush.msra.mxu0 %v230
        %264 = vmatpush.msra.mxu0 %v229
        %265 = vmatpush.msra.mxu0 %v228
        %266 = vmatpush.msra.mxu0 %v227
        %267 = vmatpush.msra.mxu0 %v226
        %268 = vmatpush.msra.mxu0 %v225
        %269 = vmatpush.msra.mxu0 %v224
        %270 = vmatpush.msra.mxu0 %v223
        %271 = vmatpush.msra.mxu0 %v222
        %272 = vmatmul.f32.gmra.mxu0 %v220
        %v273 = vpop.f32.mrf.mxu0
        %v274 = vadd.f32 %v255, %v273
        %275 = vdwg.mxu0
        %276 = vmatpush.msra.mxu0 %v253
        %277 = vmatpush.msra.mxu0 %v252
        %278 = vmatpush.msra.mxu0 %v251
        %279 = vmatpush.msra.mxu0 %v250
        %280 = vmatpush.msra.mxu0 %v249
        %281 = vmatpush.msra.mxu0 %v248
        %282 = vmatpush.msra.mxu0 %v247
        %283 = vmatpush.msra.mxu0 %v246
        %284 = vmatpush.msra.mxu0 %v245
        %285 = vmatpush.msra.mxu0 %v244
        %286 = vmatpush.msra.mxu0 %v243
        %287 = vmatpush.msra.mxu0 %v242
        %288 = vmatpush.msra.mxu0 %v241
        %289 = vmatpush.msra.mxu0 %v240
        %290 = vmatpush.msra.mxu0 %v239
        %291 = vmatpush.msra.mxu0 %v238
        %292 = vmatmul.f32.gmra.mxu0 %v221
        %v293 = vpop.f32.mrf.mxu0
        %v294 = vadd.f32 %v274, %v293
        %295 = vdwg.mxu0
        %296 = vadd.xlane.f32.xlu0 %v294
        %v297 = vpop.xlane.xlu0 %296
        %v298 = vmul.f32 %v297, 0.03125
        %v299 = vsub.f32 %v294, %v298
        %v300 = vlaneseq
        %v301 = vand.u32 %v300, 127
        %vm302 = vcmp.lt.s32.totalorder %v301, 32
        %v303 = vsel %vm302, %v299, 0.0
        %v304 = vmul.f32 %v303, %v303
        %305 = vadd.xlane.f32.xlu0 %v304
        %v306 = vpop.xlane.xlu0 %305
        %v307 = vmul.f32 %v306, 0.03125
        %v308 = vadd.f32 %v307, 1e-05
        %v309 = vrsqrt.pop %v308
        %v310 = vmul.f32 %v309, %v308
        %v311 = vmul.f32 %v310, %v309
        %v312 = vmul.f32 0.5, %v311
        %v313 = vsub.f32 1.5, %v312
        %v314 = vmul.f32 %v309, %v313
        %vm315 = vweird.f32 %v308
        %vm316 = vweird.f32 %v309
        %vm317 = vmor %vm315, %vm316
        %v318 = vsel %vm317, %v309, %v314
        %v319 = vmul.f32 %v299, %v318
        %v320 = vld [vmem:[#allocation7 + $0x1] sm:$0x1]
        %v321 = vperm.slane %v320, 0
        %v322 = vmul.f32 %v319, %v321
        %v323 = vld [vmem:[#allocation7 + $0x2] sm:$0x1]
        %v324 = vperm.slane %v323, 0
        %v325 = vadd.f32 %v322, %v324
        %326 = vst [vmem:[%s219] sm:$0xff] %v325
        %s327 = sand.u32 %s97, 1
        %s328 = scalar_lea.sflag [#allocation4], %s327
        %s329 = sand.u32 %s97, 1
        %s330 = smul.addr %s329, 8
        %s331 = scalar_lea.vmem [#allocation8], %s330
        // Predicated region
        $region45: #{tpu_custom_call.1} parent=31 // pred_check
          %p332 = pneg %p107
        $region46: #{tpu_custom_call.1} parent=31 // pred_check_branch
          %334 = sbr.rel (%p332) target = $region48
        $region47: #{tpu_custom_call.1} parent=31 // pred_region
          %336 = vsyncadd %s328, 0
          %s337 = smul.addr %s21, 8
          %s338 = scalar_lea.hbm %s3, %s337
          %s340 = sshll.u32 %s331, 4
          %s341 = int_to_ptr.vmem [resolvable:$true] %s340
          %s342 = sshll.u32 %s338, 4
          %s343 = int_to_ptr.hbm [resolvable:$true] %s342
          %345 = dma.vmem_to_hbm [thread:$0]  %s341, 128, %s343, %s328
        $region48: #{tpu_custom_call.1} parent=31 // pred_fallthru
          _
      $region32: #{tpu_custom_call.1} parent=5 // pred_fallthru
        _
      %p346 = scmp.le.s32.totalorder 2, %s16
      // Predicated region
      $region49: #{tpu_custom_call.1} parent=5 // pred_check
        %p347 = pneg %p346
      $region50: #{tpu_custom_call.1} parent=5 // pred_check_branch
        %349 = sbr.rel (%p347) target = $region52
      $region51: #{tpu_custom_call.1} parent=5 // pred_region
        %s350 = ssub.s32 %s16, 2
        // Predicated region
        $region53: #{tpu_custom_call.1} parent=51 // pred_check
          %p351 = pneg %p113
        $region54: #{tpu_custom_call.1} parent=51 // pred_check_branch
          %353 = sbr.rel (%p351) target = $region56
        $region55: #{tpu_custom_call.1} parent=51 // pred_region
          %s354 = sand.u32 %s98, 1
          %s355 = scalar_lea.sflag [#allocation4], %s354
          %s356 = sand.u32 %s98, 1
          %s357 = smul.addr %s356, 8
          %s358 = scalar_lea.vmem [#allocation8], %s357
          %360 = dma.done %s355, 128
        $region56: #{tpu_custom_call.1} parent=51 // pred_fallthru
          _
      $region52: #{tpu_custom_call.1} parent=5 // pred_fallthru
        _
    $region6: #{tpu_custom_call.1} parent=1 // loop_footer
      %s20 = sadd.s32 1, %s16
    $region7: #{tpu_custom_call.1} parent=1 // loop_footer_branch
      %15 = sbr.rel target = $region3
    $region8: #{tpu_custom_call.1} parent=1 // loop_exit
      _
    %361 = vsyncpa [#allocation3], 1
    %s362 = scalar_lea.sflag [#allocation3], 1
    %363 = vsyncpa %s362, 1
    %364 = vsyncpa [#allocation6], 1
    %365 = vsyncpa [#allocation4], 1
    %s366 = scalar_lea.sflag [#allocation4], 1
    %367 = vsyncpa %s366, 1

</llo_original>
